<compile_context>
chip_gen: v6e
topology: v6e:2x2x1
jax: 0.10.0
libtpu: 0.0.40
codegen_flags: <defaults>
</compile_context>

<pallas_src>
import functools

import jax
import jax.numpy as jnp
from jax.experimental import pallas as pl
from jax.experimental.pallas import tpu as pltpu

# Logical (PyTorch) dims and lane-padded dims.
D_IN = 10
H = 100
D_OUT = 784
H_PAD = 128       # 100 -> 128 (one 128-lane vreg)
D_OUT_PAD = 896   # 784 -> 896 (7 * 128) -- used only for the fc3 matmul;
                  # the HBM output is written at its true width of 784.


def _round_up(n, m):
    return ((n + m - 1) // m) * m


def _mlp_kernel(seed_ref,                                   # scalar prefetch (SMEM)
                x_ref, w1_ref, b1_ref, w2_ref, b2_ref, w3_ref, b3_ref,
                out_ref, *, training):
    x = x_ref[...]

    if training:
        seed_u = seed_ref[0].astype(jnp.uint32)
        base_row = (pl.program_id(0) * x_ref.shape[0]).astype(jnp.uint32)

        def keep_mask(shape, layer_salt):
            # Deterministic counter-based hash PRNG (murmur-style finalizer);
            # keep on the sign bit => p_keep = 0.5.  Counter is unique per
            # (seed, layer, global row, col); cols < 1024 so a shift suffices.
            rows = jax.lax.broadcasted_iota(jnp.uint32, shape, 0) + base_row
            cols = jax.lax.broadcasted_iota(jnp.uint32, shape, 1)
            u = (rows << jnp.uint32(10)) | cols
            u = u ^ (seed_u * jnp.uint32(0x9E3779B9) + jnp.uint32(layer_salt))
            u = u ^ (u >> 16)
            u = u * jnp.uint32(0x7FEB352D)
            u = u ^ (u >> 15)
            u = u * jnp.uint32(0x846CA68B)
            return (u >> 31) == jnp.uint32(0)

    # --- fc1 + ReLU (+ dropout mask; the 1/p scale is folded into w2) ---
    h1 = jnp.dot(x, w1_ref[...], preferred_element_type=jnp.float32) + b1_ref[...]
    h1 = jnp.maximum(h1, 0.0)
    if training:
        h1 = jnp.where(keep_mask(h1.shape, 0x1111), h1, 0.0)

    # --- fc2 + ReLU (+ dropout mask; the 1/p scale is folded into w3) ---
    h2 = jnp.dot(h1, w2_ref[...], preferred_element_type=jnp.float32) + b2_ref[...]
    h2 = jnp.maximum(h2, 0.0)
    if training:
        h2 = jnp.where(keep_mask(h2.shape, 0x2222), h2, 0.0)

    # --- fc3 (no activation); store only the un-padded 784 columns ---
    out = jnp.dot(h2, w3_ref[...], preferred_element_type=jnp.float32) + b3_ref[...]
    out_ref[...] = out[:, :out_ref.shape[1]].astype(out_ref.dtype)


def init_params(key):
    """Mirror EncoderNet.__init__: weights U(-0.5, 0.5); PyTorch-default bias
    init U(-1/sqrt(fan_in), 1/sqrt(fan_in)).  Weights are stored (in, out) so
    the kernel computes y = x @ W + b."""
    dims = [D_IN, H, H, D_OUT]
    ks = jax.random.split(key, 6)
    params = []
    for li in range(3):
        fan_in, fan_out = dims[li], dims[li + 1]
        w = jax.random.uniform(ks[2 * li], (fan_in, fan_out),
                               dtype=jnp.float32, minval=-0.5, maxval=0.5)
        bound = 1.0 / (fan_in ** 0.5)
        b = jax.random.uniform(ks[2 * li + 1], (1, fan_out),
                               dtype=jnp.float32, minval=-bound, maxval=bound)
        params += [w, b]
    return tuple(params)


def pad_params(params, training=True):
    """Zero-pad feature dims to lane-dense widths (numerically exact) and, in
    training mode, fold the dropout 1/keep_prob scale (x2) into the weights of
    the *following* layer.  Call once at init; do NOT rebuild per forward."""
    w1, b1, w2, b2, w3, b3 = params
    f32 = jnp.float32
    s = jnp.float32(2.0 if training else 1.0)
    w1p = jnp.zeros((D_IN, H_PAD), f32).at[:, :H].set(w1.astype(f32))
    b1p = jnp.zeros((1, H_PAD), f32).at[:, :H].set(b1.astype(f32))
    w2p = jnp.zeros((H_PAD, H_PAD), f32).at[:H, :H].set(w2.astype(f32) * s)
    b2p = jnp.zeros((1, H_PAD), f32).at[:, :H].set(b2.astype(f32))
    w3p = jnp.zeros((H_PAD, D_OUT_PAD), f32).at[:H, :D_OUT].set(w3.astype(f32) * s)
    b3p = jnp.zeros((1, D_OUT_PAD), f32).at[:, :D_OUT].set(b3.astype(f32))
    return jax.device_put((w1p, b1p, w2p, b2p, w3p, b3p))


def _pick_batch_tile(B, batch_tile):
    if B <= 256:
        # Small batch: one minimal tile (multiple of 8 sublanes), no waste.
        return max(8, _round_up(B, 8))
    # Moderate/large batch: ensure >= 2 tiles so ("parallel",) can split the
    # grid across v7x's two TensorCores; tile is a multiple of 256 for the MXU.
    return min(batch_tile, _round_up(pl.cdiv(B, 2), 256))


def encoder_net_forward(x, padded_params, seed=0, *, training=True,
                        batch_tile=1024):
    """x: (B, 10) float32.  padded_params: output of pad_params(..., training)
    (the `training` flags must match).  Returns (B, 784) float32.
    training=True reproduces the PyTorch module (F.dropout is always in
    training mode there)."""
    w1p, b1p, w2p, b2p, w3p, b3p = padded_params
    B = x.shape[0]

    TB = _pick_batch_tile(B, batch_tile)
    Bp = _round_up(B, TB)
    xp = x if Bp == B else jnp.pad(x, ((0, Bp - B), (0, 0)))
    grid = (Bp // TB,)

    seed_arr = jnp.asarray([seed], dtype=jnp.int32)

    tiled = lambda shape: pl.BlockSpec(shape, lambda i, s: (i, 0))
    pinned = lambda shape: pl.BlockSpec(shape, lambda i, s: (0, 0))

    weight_elems = (D_IN * H_PAD + H_PAD
                    + H_PAD * H_PAD + H_PAD
                    + H_PAD * D_OUT_PAD + D_OUT_PAD)
    # Working set: double-buffered weights + double-buffered x/out tiles
    # (lane-padded widths) + materialized f32 intermediates, plus headroom.
    work_elems = (2 * weight_elems
                  + 2 * TB * H_PAD            # x tiles (lane-padded to 128)
                  + 2 * TB * D_OUT_PAD        # out tiles (lane-padded)
                  + 2 * TB * H_PAD            # h1, h2
                  + 2 * TB * D_OUT_PAD)       # fc3 result + sliced copy
    vmem_limit = min(4 * work_elems + (8 << 20), 56 << 20)

    cost = pl.CostEstimate(
        flops=2 * Bp * (D_IN * H_PAD + H_PAD * H_PAD + H_PAD * D_OUT_PAD),
        transcendentals=0,
        bytes_accessed=4 * (Bp * (D_IN + D_OUT) + weight_elems),
    )

    out = pl.pallas_call(
        functools.partial(_mlp_kernel, training=training),
        out_shape=jax.ShapeDtypeStruct((Bp, D_OUT), jnp.float32),
        grid_spec=pltpu.PrefetchScalarGridSpec(
            num_scalar_prefetch=1,
            grid=grid,
            in_specs=[
                tiled((TB, D_IN)),
                pinned((D_IN, H_PAD)), pinned((1, H_PAD)),
                pinned((H_PAD, H_PAD)), pinned((1, H_PAD)),
                pinned((H_PAD, D_OUT_PAD)), pinned((1, D_OUT_PAD)),
            ],
            out_specs=tiled((TB, D_OUT)),
        ),
        compiler_params=pltpu.CompilerParams(
            dimension_semantics=("parallel",),
            vmem_limit_bytes=vmem_limit),
        cost_estimate=cost,
    )(seed_arr, xp, w1p, b1p, w2p, b2p, w3p, b3p)

    return out if Bp == B else out[:B]


if __name__ == "__main__":
    key = jax.random.PRNGKey(0)
    k_param, k_x = jax.random.split(key)

    params = init_params(k_param)
    batch = 8          # multiple of the chosen tile -> no row pad / slice
    x = jax.random.normal(k_x, (batch, D_IN), dtype=jnp.float32)

    # Eval-mode (no dropout) numerical cross-check vs a plain-JAX reference.
    padded_eval = pad_params(params, training=False)
    out_eval = jax.block_until_ready(
        encoder_net_forward(x, padded_eval, training=False))
    w1, b1, w2, b2, w3, b3 = params
    ref = jnp.maximum(x @ w1 + b1, 0.0)
    ref = jnp.maximum(ref @ w2 + b2, 0.0)
    ref = ref @ w3 + b3
    assert out_eval.shape == (batch, D_OUT), out_eval.shape
    assert jnp.allclose(out_eval, ref, rtol=5e-2, atol=5e-2), \
        float(jnp.max(jnp.abs(out_eval - ref)))

    # Training mode (matches the PyTorch module: F.dropout always training).
    padded_train = pad_params(params, training=True)
    out = jax.block_until_ready(
        encoder_net_forward(x, padded_train, seed=0, training=True))
    assert out.shape == (batch, D_OUT), out.shape
    assert out.dtype == jnp.float32, out.dtype
    assert bool(jnp.all(jnp.isfinite(out)))
    print("KERNEL_OK")
</pallas_src>

<mosaic_0001>
module attributes {stable_mosaic.version = 11 : i64} {
  func.func @_mlp_kernel(%arg0: i32, %arg1: memref<1xi32, #tpu.memory_space<smem>>, %arg2: memref<8x10xf32, #tpu.memory_space<vmem>>, %arg3: memref<10x128xf32, #tpu.memory_space<vmem>>, %arg4: memref<1x128xf32, #tpu.memory_space<vmem>>, %arg5: memref<128x128xf32, #tpu.memory_space<vmem>>, %arg6: memref<1x128xf32, #tpu.memory_space<vmem>>, %arg7: memref<128x896xf32, #tpu.memory_space<vmem>>, %arg8: memref<1x896xf32, #tpu.memory_space<vmem>>, %arg9: memref<8x784xf32, #tpu.memory_space<vmem>>) attributes {dimension_semantics = [#tpu.dimension_semantics<parallel>], iteration_bounds = array<i64: 1>, scalar_prefetch = 1 : i64, scratch_operands = 0 : i64, tpu.core_type = #tpu.core_type<tc>, window_params = [{transform_indices = @transform_0, window_bounds = array<i64: 8, 10>}, {pipeline_mode = #tpu.pipeline_mode<synchronous>, transform_indices = @transform_1, window_bounds = array<i64: 10, 128>}, {pipeline_mode = #tpu.pipeline_mode<synchronous>, transform_indices = @transform_2, window_bounds = array<i64: 1, 128>}, {pipeline_mode = #tpu.pipeline_mode<synchronous>, transform_indices = @transform_3, window_bounds = array<i64: 128, 128>}, {pipeline_mode = #tpu.pipeline_mode<synchronous>, transform_indices = @transform_4, window_bounds = array<i64: 1, 128>}, {pipeline_mode = #tpu.pipeline_mode<synchronous>, transform_indices = @transform_5, window_bounds = array<i64: 128, 896>}, {pipeline_mode = #tpu.pipeline_mode<synchronous>, transform_indices = @transform_6, window_bounds = array<i64: 1, 896>}, {transform_indices = @transform_7, window_bounds = array<i64: 8, 784>}]} {
    %c0 = arith.constant 0 : index
    %c0_0 = arith.constant 0 : index
    %0 = vector.load %arg2[%c0, %c0_0] : memref<8x10xf32, #tpu.memory_space<vmem>>, vector<8x10xf32>
    %c0_1 = arith.constant 0 : index
    %c0_2 = arith.constant 0 : index
    %1 = vector.load %arg3[%c0_1, %c0_2] : memref<10x128xf32, #tpu.memory_space<vmem>>, vector<10x128xf32>
    %cst = arith.constant dense<0.000000e+00> : vector<8x128xf32>
    %2 = tpu.matmul %0, %1, %cst {dimension_numbers = #tpu.dot_dimension_numbers<[1], [0], [0], [1], [0, 0, 1, 1], [], []>} : vector<8x10xf32>, vector<10x128xf32>, vector<8x128xf32> -> vector<8x128xf32>
    %c0_3 = arith.constant 0 : index
    %c0_4 = arith.constant 0 : index
    %3 = vector.load %arg4[%c0_3, %c0_4] : memref<1x128xf32, #tpu.memory_space<vmem>>, vector<1x128xf32>
    %4 = vector.broadcast %3 : vector<1x128xf32> to vector<8x128xf32>
    %5 = arith.addf %2, %4 : vector<8x128xf32>
    %cst_5 = arith.constant 0.000000e+00 : f32
    %6 = vector.broadcast %cst_5 : f32 to vector<8x128xf32>
    %7 = arith.maximumf %5, %6 : vector<8x128xf32>
    %c0_6 = arith.constant 0 : index
    %c0_7 = arith.constant 0 : index
    %8 = vector.load %arg5[%c0_6, %c0_7] : memref<128x128xf32, #tpu.memory_space<vmem>>, vector<128x128xf32>
    %cst_8 = arith.constant dense<0.000000e+00> : vector<8x128xf32>
    %9 = tpu.matmul %7, %8, %cst_8 {dimension_numbers = #tpu.dot_dimension_numbers<[1], [0], [0], [1], [0, 0, 1, 1], [], []>} : vector<8x128xf32>, vector<128x128xf32>, vector<8x128xf32> -> vector<8x128xf32>
    %c0_9 = arith.constant 0 : index
    %c0_10 = arith.constant 0 : index
    %10 = vector.load %arg6[%c0_9, %c0_10] : memref<1x128xf32, #tpu.memory_space<vmem>>, vector<1x128xf32>
    %11 = vector.broadcast %10 : vector<1x128xf32> to vector<8x128xf32>
    %12 = arith.addf %9, %11 : vector<8x128xf32>
    %cst_11 = arith.constant 0.000000e+00 : f32
    %13 = vector.broadcast %cst_11 : f32 to vector<8x128xf32>
    %14 = arith.maximumf %12, %13 : vector<8x128xf32>
    %c0_12 = arith.constant 0 : index
    %c0_13 = arith.constant 0 : index
    %15 = vector.load %arg7[%c0_12, %c0_13] : memref<128x896xf32, #tpu.memory_space<vmem>>, vector<128x896xf32>
    %cst_14 = arith.constant dense<0.000000e+00> : vector<8x896xf32>
    %16 = tpu.matmul %14, %15, %cst_14 {dimension_numbers = #tpu.dot_dimension_numbers<[1], [0], [0], [1], [0, 0, 1, 1], [], []>} : vector<8x128xf32>, vector<128x896xf32>, vector<8x896xf32> -> vector<8x896xf32>
    %c0_15 = arith.constant 0 : index
    %c0_16 = arith.constant 0 : index
    %17 = vector.load %arg8[%c0_15, %c0_16] : memref<1x896xf32, #tpu.memory_space<vmem>>, vector<1x896xf32>
    %18 = vector.broadcast %17 : vector<1x896xf32> to vector<8x896xf32>
    %19 = arith.addf %16, %18 : vector<8x896xf32>
    %20 = vector.extract_strided_slice %19 {offsets = [0, 0], sizes = [8, 784], strides = [1, 1]} : vector<8x896xf32> to vector<8x784xf32>
    %c0_17 = arith.constant 0 : index
    %c0_18 = arith.constant 0 : index
    %21 = vector.load %arg9[%c0_17, %c0_18] : memref<8x784xf32, #tpu.memory_space<vmem>>, vector<8x784xf32>
    tpu.vector_store %arg9[%c0_17, %c0_18], %20 {strides = array<i32>} : memref<8x784xf32, #tpu.memory_space<vmem>>, vector<8x784xf32>,
    return
  }
  func.func @transform_0(%arg0: i32, %arg1: memref<1xi32, #tpu.memory_space<smem>>) -> (i32, i32) {
    %c0_i32 = arith.constant 0 : i32
    %c0_i32_0 = arith.constant 0 : i32
    return %arg0, %c0_i32 : i32, i32
  }
  func.func @transform_1(%arg0: i32, %arg1: memref<1xi32, #tpu.memory_space<smem>>) -> (i32, i32) {
    %c0_i32 = arith.constant 0 : i32
    %c0_i32_0 = arith.constant 0 : i32
    %c0_i32_1 = arith.constant 0 : i32
    return %c0_i32, %c0_i32_0 : i32, i32
  }
  func.func @transform_2(%arg0: i32, %arg1: memref<1xi32, #tpu.memory_space<smem>>) -> (i32, i32) {
    %c0_i32 = arith.constant 0 : i32
    %c0_i32_0 = arith.constant 0 : i32
    %c0_i32_1 = arith.constant 0 : i32
    return %c0_i32, %c0_i32_0 : i32, i32
  }
  func.func @transform_3(%arg0: i32, %arg1: memref<1xi32, #tpu.memory_space<smem>>) -> (i32, i32) {
    %c0_i32 = arith.constant 0 : i32
    %c0_i32_0 = arith.constant 0 : i32
    %c0_i32_1 = arith.constant 0 : i32
    return %c0_i32, %c0_i32_0 : i32, i32
  }
  func.func @transform_4(%arg0: i32, %arg1: memref<1xi32, #tpu.memory_space<smem>>) -> (i32, i32) {
    %c0_i32 = arith.constant 0 : i32
    %c0_i32_0 = arith.constant 0 : i32
    %c0_i32_1 = arith.constant 0 : i32
    return %c0_i32, %c0_i32_0 : i32, i32
  }
  func.func @transform_5(%arg0: i32, %arg1: memref<1xi32, #tpu.memory_space<smem>>) -> (i32, i32) {
    %c0_i32 = arith.constant 0 : i32
    %c0_i32_0 = arith.constant 0 : i32
    %c0_i32_1 = arith.constant 0 : i32
    return %c0_i32, %c0_i32_0 : i32, i32
  }
  func.func @transform_6(%arg0: i32, %arg1: memref<1xi32, #tpu.memory_space<smem>>) -> (i32, i32) {
    %c0_i32 = arith.constant 0 : i32
    %c0_i32_0 = arith.constant 0 : i32
    %c0_i32_1 = arith.constant 0 : i32
    return %c0_i32, %c0_i32_0 : i32, i32
  }
  func.func @transform_7(%arg0: i32, %arg1: memref<1xi32, #tpu.memory_space<smem>>) -> (i32, i32) {
    %c0_i32 = arith.constant 0 : i32
    %c0_i32_0 = arith.constant 0 : i32
    return %arg0, %c0_i32 : i32, i32
  }
}

</mosaic_0001>

<llo_original>
// kernel: tpu_custom_call.1
$region0: #{tpu_custom_call.1}
  #allocation0 [shape = 'u32[]', space=smem, size = 0x4, offset = 0x4, fixed_abs, tag = 'smem constant byte address 0x4 - core index']
  #allocation1 [shape = 'u32[144,128]{1,0:T(1,128)}', space=vmem, size = 0x12000, scoped, tag = 'internal scratch']
  #allocation2 [shape = 's32[1]{0}', space=sflag, size = 0x4, scoped, tag = 'scoped memory for tpu_custom_call.1']
  #allocation3 [shape = 's32[1]{0:T(128)S(6)}', space=smem, size = 0x200, scoped, tag = 'prefetched SMEM operand 0']
  %s0 = inlined_call_operand.<no memory space> [shape: s32[1], index: 0, kind: input, shape index: {}]
  %s1 = inlined_call_operand.hbm [shape: f32[8,10], index: 1, kind: input, shape index: {}]
  %s2 = inlined_call_operand.hbm [shape: f32[10,128], index: 2, kind: input, shape index: {}]
  %s3 = inlined_call_operand.vmem [shape: f32[1,128], index: 3, kind: input, shape index: {}]
  %s4 = inlined_call_operand.hbm [shape: f32[128,128], index: 4, kind: input, shape index: {}]
  %s5 = inlined_call_operand.vmem [shape: f32[1,128], index: 5, kind: input, shape index: {}]
  %s6 = inlined_call_operand.hbm [shape: f32[128,896], index: 6, kind: input, shape index: {}]
  %s7 = inlined_call_operand.vmem [shape: f32[1,896], index: 7, kind: input, shape index: {}]
  %s8 = inlined_call_operand.hbm [shape: f32[8,784], index: 8, kind: output, shape index: {}]
  %s9 = sld [smem:[#allocation0]]
  $region54: #{tpu_custom_call.1} parent=0
    _
  %s11 = ssub.s32 1, %s9
  %s12 = scalar_select 0, %s11, %s9
  %13 = sst [smem:[#allocation3]] %s0
  $region1: #{tpu_custom_call.1} parent=0
    #allocation4 [shape = 'u8[4096]{0}', space=vmem, size = 0x1000, scoped, tag = 'input window, operand 1, single buffered']
    #allocation5 [shape = 's32[1]{0}', space=sflag, size = 0x4, scoped, tag = 'scoped memory for tpu_custom_call.1']
    #allocation6 [shape = 's32[1]{0}', space=sflag, size = 0x4, scoped, tag = 'scoped memory for tpu_custom_call.1']
    #allocation7 [shape = 'u8[8192]{0}', space=vmem, size = 0x2000, scoped, tag = 'input window, operand 2, single buffered']
    #allocation8 [shape = 's32[1]{0}', space=sflag, size = 0x4, scoped, tag = 'scoped memory for tpu_custom_call.1']
    #allocation9 [shape = 'u8[65536]{0}', space=vmem, size = 0x10000, scoped, tag = 'input window, operand 4, single buffered']
    #allocation10 [shape = 'u8[458752]{0}', space=vmem, size = 0x70000, scoped, tag = 'input window, operand 6, single buffered']
    #allocation11 [shape = 's32[1]{0}', space=sflag, size = 0x4, scoped, tag = 'scoped memory for tpu_custom_call.1']
    #allocation12 [shape = 'u8[28672]{0}', space=vmem, size = 0x7000, scoped, tag = 'output window, operand 0, single buffered']
    %14 = vsyncpa [#allocation5], 0
    %15 = vsyncpa [#allocation8], 0
    %16 = vsyncpa [#allocation11], 0
    %17 = vsyncpa [#allocation6], 0
    // Predicated region
    $region2: #{tpu_custom_call.1} parent=1 // pred_check
      _
    $region3: #{tpu_custom_call.1} parent=1 // pred_check_branch
      %19 = sbr.rel (0) target = $region5
    $region4: #{tpu_custom_call.1} parent=1 // pred_region
      %s21 = ssub.s32 128, 128
      %22 = vsyncadd [#allocation5], %s21
      %s24 = sshll.u32 [#allocation4], 4
      %s25 = int_to_ptr.vmem [resolvable:$true] %s24
      %27 = dma.hbm_to_vmem [thread:$0]  %s1, 128, %s25, [#allocation5]
    $region5: #{tpu_custom_call.1} parent=1 // pred_fallthru
      _
    // Predicated region
    $region6: #{tpu_custom_call.1} parent=1 // pred_check
      _
    $region7: #{tpu_custom_call.1} parent=1 // pred_check_branch
      %29 = sbr.rel (0) target = $region9
    $region8: #{tpu_custom_call.1} parent=1 // pred_region
      %s31 = ssub.s32 256, 256
      %32 = vsyncadd [#allocation8], %s31
      %s33 = sshll.u32 [#allocation7], 4
      %s34 = int_to_ptr.vmem [resolvable:$true] %s33
      %39 = dma.hbm_to_vmem [thread:$0]  %s2, 256, %s34, [#allocation8], 128, 128, 8
    $region9: #{tpu_custom_call.1} parent=1 // pred_fallthru
      _
    // Predicated region
    $region10: #{tpu_custom_call.1} parent=1 // pred_check
      _
    $region11: #{tpu_custom_call.1} parent=1 // pred_check_branch
      %41 = sbr.rel (0) target = $region13
    $region12: #{tpu_custom_call.1} parent=1 // pred_region
      _
    $region13: #{tpu_custom_call.1} parent=1 // pred_fallthru
      _
    // Predicated region
    $region14: #{tpu_custom_call.1} parent=1 // pred_check
      _
    $region15: #{tpu_custom_call.1} parent=1 // pred_check_branch
      %43 = sbr.rel (0) target = $region17
    $region16: #{tpu_custom_call.1} parent=1 // pred_region
      %s45 = ssub.s32 2048, 2048
      %46 = vsyncadd [#allocation8], %s45
      %s47 = sshll.u32 [#allocation9], 4
      %s48 = int_to_ptr.vmem [resolvable:$true] %s47
      %53 = dma.hbm_to_vmem [thread:$0]  %s4, 2048, %s48, [#allocation8], 128, 128, 8
    $region17: #{tpu_custom_call.1} parent=1 // pred_fallthru
      _
    // Predicated region
    $region18: #{tpu_custom_call.1} parent=1 // pred_check
      _
    $region19: #{tpu_custom_call.1} parent=1 // pred_check_branch
      %55 = sbr.rel (0) target = $region21
    $region20: #{tpu_custom_call.1} parent=1 // pred_region
      _
    $region21: #{tpu_custom_call.1} parent=1 // pred_fallthru
      _
    // Predicated region
    $region22: #{tpu_custom_call.1} parent=1 // pred_check
      _
    $region23: #{tpu_custom_call.1} parent=1 // pred_check_branch
      %57 = sbr.rel (0) target = $region25
    $region24: #{tpu_custom_call.1} parent=1 // pred_region
      %s59 = ssub.s32 14336, 14336
      %60 = vsyncadd [#allocation11], %s59
      %s61 = sshll.u32 [#allocation10], 4
      %s62 = int_to_ptr.vmem [resolvable:$true] %s61
      %67 = dma.hbm_to_vmem [thread:$0]  %s6, 14336, %s62, [#allocation11], 896, 896, 56
    $region25: #{tpu_custom_call.1} parent=1 // pred_fallthru
      _
    // Predicated region
    $region26: #{tpu_custom_call.1} parent=1 // pred_check
      _
    $region27: #{tpu_custom_call.1} parent=1 // pred_check_branch
      %69 = sbr.rel (0) target = $region29
    $region28: #{tpu_custom_call.1} parent=1 // pred_region
      _
    $region29: #{tpu_custom_call.1} parent=1 // pred_fallthru
      _
    // Predicated region
    $region30: #{tpu_custom_call.1} parent=1 // pred_check
      _
    $region31: #{tpu_custom_call.1} parent=1 // pred_check_branch
      %71 = sbr.rel (0) target = $region33
    $region32: #{tpu_custom_call.1} parent=1 // pred_region
      %72 = dma.done [#allocation5], 128
    $region33: #{tpu_custom_call.1} parent=1 // pred_fallthru
      _
    // Predicated region
    $region34: #{tpu_custom_call.1} parent=1 // pred_check
      _
    $region35: #{tpu_custom_call.1} parent=1 // pred_check_branch
      %74 = sbr.rel (0) target = $region37
    $region36: #{tpu_custom_call.1} parent=1 // pred_region
      %75 = dma.done [#allocation8], 256
    $region37: #{tpu_custom_call.1} parent=1 // pred_fallthru
      _
    // Predicated region
    $region38: #{tpu_custom_call.1} parent=1 // pred_check
      _
    $region39: #{tpu_custom_call.1} parent=1 // pred_check_branch
      %77 = sbr.rel (0) target = $region41
    $region40: #{tpu_custom_call.1} parent=1 // pred_region
      %78 = dma.done [#allocation8], 2048
    $region41: #{tpu_custom_call.1} parent=1 // pred_fallthru
      _
    // Predicated region
    $region42: #{tpu_custom_call.1} parent=1 // pred_check
      _
    $region43: #{tpu_custom_call.1} parent=1 // pred_check_branch
      %80 = sbr.rel (0) target = $region45
    $region44: #{tpu_custom_call.1} parent=1 // pred_region
      %81 = dma.done [#allocation11], 14336
    $region45: #{tpu_custom_call.1} parent=1 // pred_fallthru
      _
    %v82 = vld [vmem:[#allocation4] sm:$0xff]
    %v83 = vld [vmem:[#allocation7] sm:$0xff]
    %v84 = vld [vmem:[#allocation7 + $0x8] sm:$0x3]
    %v85 = vld [vmem:[%s3] sm:$0x1]
    %v87 = vlaneseq
    %v88 = vshrl.u32 %v87, 7
    %v89 = vsub.s32 0, %v88
    %v90 = vrot.slane %v85, %v89
    %vm92 = vcmask 80896
    %v94 = vsel %vm92, %v82, 0
    %vm96 = vcmask 1041408
    %v98 = vsel %vm96, %v84, 0
    %100 = vmatprep.subr.mxu0 0.0
    %101 = vmatpush1.msra.mxu0 0.0
    %102 = vmatprep.subr.mxu0 0.0
    %103 = vmatpush1.msra.mxu0 0.0
    %104 = vmatprep.subr.mxu0 0.0
    %105 = vmatpush1.msra.mxu0 0.0
    %106 = vmatprep.subr.mxu0 0.0
    %107 = vmatpush1.msra.mxu0 0.0
    %108 = vmatprep.subr.mxu0 0.0
    %109 = vmatpush1.msra.mxu0 0.0
    %110 = vmatprep.subr.mxu0 0.0
    %111 = vmatpush1.msra.mxu0 0.0
    %112 = vmatprep.subr.mxu0 0.0
    %113 = vmatpush1.msra.mxu0 0.0
    %114 = vmatprep.subr.mxu0 0.0
    %115 = vmatpush1.msra.mxu0 0.0
    %116 = vmatprep.subr.mxu0 0.0
    %117 = vmatpush1.msra.mxu0 0.0
    %118 = vmatprep.subr.mxu0 0.0
    %119 = vmatpush1.msra.mxu0 0.0
    %120 = vmatprep.subr.mxu0 0.0
    %121 = vmatpush1.msra.mxu0 0.0
    %122 = vmatprep.subr.mxu0 0.0
    %123 = vmatpush1.msra.mxu0 0.0
    %124 = vmatprep.subr.mxu0 0.0
    %125 = vmatpush1.msra.mxu0 0.0
    %126 = vmatprep.subr.mxu0 0.0
    %127 = vmatpush1.msra.mxu0 0.0
    %128 = vmatprep.subr.mxu0 0.0
    %129 = vmatpush1.msra.mxu0 %v98
    %130 = vmatprep.subr.mxu0 0.0
    %131 = vmatpush1.msra.mxu0 %v83
    %132 = vmatprep.subr.mxu0 0.0
    %133 = vmatpush2.msra.mxu0 0.0
    %134 = vmatprep.subr.mxu0 0.0
    %135 = vmatpush2.msra.mxu0 0.0
    %136 = vmatprep.subr.mxu0 0.0
    %137 = vmatpush2.msra.mxu0 0.0
    %138 = vmatprep.subr.mxu0 0.0
    %139 = vmatpush2.msra.mxu0 0.0
    %140 = vmatprep.subr.mxu0 0.0
    %141 = vmatpush2.msra.mxu0 0.0
    %142 = vmatprep.subr.mxu0 0.0
    %143 = vmatpush2.msra.mxu0 0.0
    %144 = vmatprep.subr.mxu0 0.0
    %145 = vmatpush2.msra.mxu0 0.0
    %146 = vmatprep.subr.mxu0 0.0
    %147 = vmatpush2.msra.mxu0 0.0
    %148 = vmatprep.subr.mxu0 0.0
    %149 = vmatpush2.msra.mxu0 0.0
    %150 = vmatprep.subr.mxu0 0.0
    %151 = vmatpush2.msra.mxu0 0.0
    %152 = vmatprep.subr.mxu0 0.0
    %153 = vmatpush2.msra.mxu0 0.0
    %154 = vmatprep.subr.mxu0 0.0
    %155 = vmatpush2.msra.mxu0 0.0
    %156 = vmatprep.subr.mxu0 0.0
    %157 = vmatpush2.msra.mxu0 0.0
    %158 = vmatprep.subr.mxu0 0.0
    %159 = vmatpush2.msra.mxu0 0.0
    %160 = vmatprep.subr.mxu0 0.0
    %161 = vmatpush2.msra.mxu0 0.0
    %162 = vmatprep.subr.mxu0 0.0
    %163 = vmatpush2.msra.mxu0 0.0
    %164 = vmatprep.mubr.f32.mxu0 0.0
    %165 = vmatmul.mubr.f32.gmra.mxu0 %v94
    %v166 = vpop.f32.mrf.mxu0
    %v167 = vadd.f32 %v90, %v166
    %v168 = vpop.f32.mrf.mxu0
    %169 = vdwg.mxu0
    %v170 = vmax.f32 %v167, 0.0
    %v171 = vld [vmem:[#allocation9] sm:$0xff]
    %v172 = vld [vmem:[#allocation9 + $0x8] sm:$0xff]
    %v173 = vld [vmem:[#allocation9 + $0x10] sm:$0xff]
    %v174 = vld [vmem:[#allocation9 + $0x18] sm:$0xff]
    %v175 = vld [vmem:[#allocation9 + $0x20] sm:$0xff]
    %v176 = vld [vmem:[#allocation9 + $0x28] sm:$0xff]
    %v177 = vld [vmem:[#allocation9 + $0x30] sm:$0xff]
    %v178 = vld [vmem:[#allocation9 + $0x38] sm:$0xff]
    %v179 = vld [vmem:[#allocation9 + $0x40] sm:$0xff]
    %v180 = vld [vmem:[#allocation9 + $0x48] sm:$0xff]
    %v181 = vld [vmem:[#allocation9 + $0x50] sm:$0xff]
    %v182 = vld [vmem:[#allocation9 + $0x58] sm:$0xff]
    %v183 = vld [vmem:[#allocation9 + $0x60] sm:$0xff]
    %v184 = vld [vmem:[#allocation9 + $0x68] sm:$0xff]
    %v185 = vld [vmem:[#allocation9 + $0x70] sm:$0xff]
    %v186 = vld [vmem:[#allocation9 + $0x78] sm:$0xff]
    %v187 = vld [vmem:[%s5] sm:$0x1]
    %v189 = vlaneseq
    %v190 = vshrl.u32 %v189, 7
    %v191 = vsub.s32 0, %v190
    %v192 = vrot.slane %v187, %v191
    %194 = vmatprep.subr.mxu0 0.0
    %195 = vmatpush1.msra.mxu0 %v186
    %196 = vmatprep.subr.mxu0 0.0
    %197 = vmatpush1.msra.mxu0 %v185
    %198 = vmatprep.subr.mxu0 0.0
    %199 = vmatpush1.msra.mxu0 %v184
    %200 = vmatprep.subr.mxu0 0.0
    %201 = vmatpush1.msra.mxu0 %v183
    %202 = vmatprep.subr.mxu0 0.0
    %203 = vmatpush1.msra.mxu0 %v182
    %204 = vmatprep.subr.mxu0 0.0
    %205 = vmatpush1.msra.mxu0 %v181
    %206 = vmatprep.subr.mxu0 0.0
    %207 = vmatpush1.msra.mxu0 %v180
    %208 = vmatprep.subr.mxu0 0.0
    %209 = vmatpush1.msra.mxu0 %v179
    %210 = vmatprep.subr.mxu0 0.0
    %211 = vmatpush1.msra.mxu0 %v178
    %212 = vmatprep.subr.mxu0 0.0
    %213 = vmatpush1.msra.mxu0 %v177
    %214 = vmatprep.subr.mxu0 0.0
    %215 = vmatpush1.msra.mxu0 %v176
    %216 = vmatprep.subr.mxu0 0.0
    %217 = vmatpush1.msra.mxu0 %v175
    %218 = vmatprep.subr.mxu0 0.0
    %219 = vmatpush1.msra.mxu0 %v174
    %220 = vmatprep.subr.mxu0 0.0
    %221 = vmatpush1.msra.mxu0 %v173
    %222 = vmatprep.subr.mxu0 0.0
    %223 = vmatpush1.msra.mxu0 %v172
    %224 = vmatprep.subr.mxu0 0.0
    %225 = vmatpush1.msra.mxu0 %v171
    %226 = vmatprep.subr.mxu0 0.0
    %227 = vmatpush2.msra.mxu0 0.0
    %228 = vmatprep.subr.mxu0 0.0
    %229 = vmatpush2.msra.mxu0 0.0
    %230 = vmatprep.subr.mxu0 0.0
    %231 = vmatpush2.msra.mxu0 0.0
    %232 = vmatprep.subr.mxu0 0.0
    %233 = vmatpush2.msra.mxu0 0.0
    %234 = vmatprep.subr.mxu0 0.0
    %235 = vmatpush2.msra.mxu0 0.0
    %236 = vmatprep.subr.mxu0 0.0
    %237 = vmatpush2.msra.mxu0 0.0
    %238 = vmatprep.subr.mxu0 0.0
    %239 = vmatpush2.msra.mxu0 0.0
    %240 = vmatprep.subr.mxu0 0.0
    %241 = vmatpush2.msra.mxu0 0.0
    %242 = vmatprep.subr.mxu0 0.0
    %243 = vmatpush2.msra.mxu0 0.0
    %244 = vmatprep.subr.mxu0 0.0
    %245 = vmatpush2.msra.mxu0 0.0
    %246 = vmatprep.subr.mxu0 0.0
    %247 = vmatpush2.msra.mxu0 0.0
    %248 = vmatprep.subr.mxu0 0.0
    %249 = vmatpush2.msra.mxu0 0.0
    %250 = vmatprep.subr.mxu0 0.0
    %251 = vmatpush2.msra.mxu0 0.0
    %252 = vmatprep.subr.mxu0 0.0
    %253 = vmatpush2.msra.mxu0 0.0
    %254 = vmatprep.subr.mxu0 0.0
    %255 = vmatpush2.msra.mxu0 0.0
    %256 = vmatprep.subr.mxu0 0.0
    %257 = vmatpush2.msra.mxu0 0.0
    %258 = vmatprep.mubr.f32.mxu0 0.0
    %259 = vmatmul.mubr.f32.gmra.mxu0 %v170
    %v260 = vpop.f32.mrf.mxu0
    %v261 = vadd.f32 %v192, %v260
    %v262 = vpop.f32.mrf.mxu0
    %263 = vdwg.mxu0
    %v264 = vmax.f32 %v261, 0.0
    %v265 = vld [vmem:[#allocation10] sm:$0xff]
    %v266 = vld [vmem:[#allocation10 + $0x8] sm:$0xff]
    %v267 = vld [vmem:[#allocation10 + $0x10] sm:$0xff]
    %v268 = vld [vmem:[#allocation10 + $0x18] sm:$0xff]
    %v269 = vld [vmem:[#allocation10 + $0x20] sm:$0xff]
    %v270 = vld [vmem:[#allocation10 + $0x28] sm:$0xff]
    %v271 = vld [vmem:[#allocation10 + $0x30] sm:$0xff]
    %v272 = vld [vmem:[#allocation10 + $0x38] sm:$0xff]
    %v273 = vld [vmem:[#allocation10 + $0x40] sm:$0xff]
    %v274 = vld [vmem:[#allocation10 + $0x48] sm:$0xff]
    %v275 = vld [vmem:[#allocation10 + $0x50] sm:$0xff]
    %v276 = vld [vmem:[#allocation10 + $0x58] sm:$0xff]
    %v277 = vld [vmem:[#allocation10 + $0x60] sm:$0xff]
    %v278 = vld [vmem:[#allocation10 + $0x68] sm:$0xff]
    %v279 = vld [vmem:[#allocation10 + $0x70] sm:$0xff]
    %v280 = vld [vmem:[#allocation10 + $0x78] sm:$0xff]
    %v281 = vld [vmem:[#allocation10 + $0x80] sm:$0xff]
    %v282 = vld [vmem:[#allocation10 + $0x88] sm:$0xff]
    %v283 = vld [vmem:[#allocation10 + $0x90] sm:$0xff]
    %v284 = vld [vmem:[#allocation10 + $0x98] sm:$0xff]
    %v285 = vld [vmem:[#allocation10 + $0xa0] sm:$0xff]
    %v286 = vld [vmem:[#allocation10 + $0xa8] sm:$0xff]
    %v287 = vld [vmem:[#allocation10 + $0xb0] sm:$0xff]
    %v288 = vld [vmem:[#allocation10 + $0xb8] sm:$0xff]
    %v289 = vld [vmem:[#allocation10 + $0xc0] sm:$0xff]
    %v290 = vld [vmem:[#allocation10 + $0xc8] sm:$0xff]
    %v291 = vld [vmem:[#allocation10 + $0xd0] sm:$0xff]
    %v292 = vld [vmem:[#allocation10 + $0xd8] sm:$0xff]
    %v293 = vld [vmem:[#allocation10 + $0xe0] sm:$0xff]
    %v294 = vld [vmem:[#allocation10 + $0xe8] sm:$0xff]
    %v295 = vld [vmem:[#allocation10 + $0xf0] sm:$0xff]
    %v296 = vld [vmem:[#allocation10 + $0xf8] sm:$0xff]
    %v297 = vld [vmem:[#allocation10 + $0x100] sm:$0xff]
    %v298 = vld [vmem:[#allocation10 + $0x108] sm:$0xff]
    %v299 = vld [vmem:[#allocation10 + $0x110] sm:$0xff]
    %v300 = vld [vmem:[#allocation10 + $0x118] sm:$0xff]
    %v301 = vld [vmem:[#allocation10 + $0x120] sm:$0xff]
    %v302 = vld [vmem:[#allocation10 + $0x128] sm:$0xff]
    %v303 = vld [vmem:[#allocation10 + $0x130] sm:$0xff]
    %v304 = vld [vmem:[#allocation10 + $0x138] sm:$0xff]
    %v305 = vld [vmem:[#allocation10 + $0x140] sm:$0xff]
    %v306 = vld [vmem:[#allocation10 + $0x148] sm:$0xff]
    %v307 = vld [vmem:[#allocation10 + $0x150] sm:$0xff]
    %v308 = vld [vmem:[#allocation10 + $0x158] sm:$0xff]
    %v309 = vld [vmem:[#allocation10 + $0x160] sm:$0xff]
    %v310 = vld [vmem:[#allocation10 + $0x168] sm:$0xff]
    %v311 = vld [vmem:[#allocation10 + $0x170] sm:$0xff]
    %v312 = vld [vmem:[#allocation10 + $0x178] sm:$0xff]
    %v313 = vld [vmem:[#allocation10 + $0x180] sm:$0xff]
    %v314 = vld [vmem:[#allocation10 + $0x188] sm:$0xff]
    %v315 = vld [vmem:[#allocation10 + $0x190] sm:$0xff]
    %v316 = vld [vmem:[#allocation10 + $0x198] sm:$0xff]
    %v317 = vld [vmem:[#allocation10 + $0x1a0] sm:$0xff]
    %v318 = vld [vmem:[#allocation10 + $0x1a8] sm:$0xff]
    %v319 = vld [vmem:[#allocation10 + $0x1b0] sm:$0xff]
    %v320 = vld [vmem:[#allocation10 + $0x1b8] sm:$0xff]
    %v321 = vld [vmem:[#allocation10 + $0x1c0] sm:$0xff]
    %v322 = vld [vmem:[#allocation10 + $0x1c8] sm:$0xff]
    %v323 = vld [vmem:[#allocation10 + $0x1d0] sm:$0xff]
    %v324 = vld [vmem:[#allocation10 + $0x1d8] sm:$0xff]
    %v325 = vld [vmem:[#allocation10 + $0x1e0] sm:$0xff]
    %v326 = vld [vmem:[#allocation10 + $0x1e8] sm:$0xff]
    %v327 = vld [vmem:[#allocation10 + $0x1f0] sm:$0xff]
    %v328 = vld [vmem:[#allocation10 + $0x1f8] sm:$0xff]
    %v329 = vld [vmem:[#allocation10 + $0x200] sm:$0xff]
    %v330 = vld [vmem:[#allocation10 + $0x208] sm:$0xff]
    %v331 = vld [vmem:[#allocation10 + $0x210] sm:$0xff]
    %v332 = vld [vmem:[#allocation10 + $0x218] sm:$0xff]
    %v333 = vld [vmem:[#allocation10 + $0x220] sm:$0xff]
    %v334 = vld [vmem:[#allocation10 + $0x228] sm:$0xff]
    %v335 = vld [vmem:[#allocation10 + $0x230] sm:$0xff]
    %v336 = vld [vmem:[#allocation10 + $0x238] sm:$0xff]
    %v337 = vld [vmem:[#allocation10 + $0x240] sm:$0xff]
    %v338 = vld [vmem:[#allocation10 + $0x248] sm:$0xff]
    %v339 = vld [vmem:[#allocation10 + $0x250] sm:$0xff]
    %v340 = vld [vmem:[#allocation10 + $0x258] sm:$0xff]
    %v341 = vld [vmem:[#allocation10 + $0x260] sm:$0xff]
    %v342 = vld [vmem:[#allocation10 + $0x268] sm:$0xff]
    %v343 = vld [vmem:[#allocation10 + $0x270] sm:$0xff]
    %v344 = vld [vmem:[#allocation10 + $0x278] sm:$0xff]
    %v345 = vld [vmem:[#allocation10 + $0x280] sm:$0xff]
    %v346 = vld [vmem:[#allocation10 + $0x288] sm:$0xff]
    %v347 = vld [vmem:[#allocation10 + $0x290] sm:$0xff]
    %v348 = vld [vmem:[#allocation10 + $0x298] sm:$0xff]
    %v349 = vld [vmem:[#allocation10 + $0x2a0] sm:$0xff]
    %v350 = vld [vmem:[#allocation10 + $0x2a8] sm:$0xff]
    %v351 = vld [vmem:[#allocation10 + $0x2b0] sm:$0xff]
    %v352 = vld [vmem:[#allocation10 + $0x2b8] sm:$0xff]
    %v353 = vld [vmem:[#allocation10 + $0x2c0] sm:$0xff]
    %v354 = vld [vmem:[#allocation10 + $0x2c8] sm:$0xff]
    %v355 = vld [vmem:[#allocation10 + $0x2d0] sm:$0xff]
    %v356 = vld [vmem:[#allocation10 + $0x2d8] sm:$0xff]
    %v357 = vld [vmem:[#allocation10 + $0x2e0] sm:$0xff]
    %v358 = vld [vmem:[#allocation10 + $0x2e8] sm:$0xff]
    %v359 = vld [vmem:[#allocation10 + $0x2f0] sm:$0xff]
    %v360 = vld [vmem:[#allocation10 + $0x2f8] sm:$0xff]
    %v361 = vld [vmem:[#allocation10 + $0x300] sm:$0xff]
    %v362 = vld [vmem:[#allocation10 + $0x308] sm:$0xff]
    %v363 = vld [vmem:[#allocation10 + $0x310] sm:$0xff]
    %v364 = vld [vmem:[#allocation10 + $0x318] sm:$0xff]
    %v365 = vld [vmem:[#allocation10 + $0x320] sm:$0xff]
    %v366 = vld [vmem:[#allocation10 + $0x328] sm:$0xff]
    %v367 = vld [vmem:[#allocation10 + $0x330] sm:$0xff]
    %v368 = vld [vmem:[#allocation10 + $0x338] sm:$0xff]
    %v369 = vld [vmem:[#allocation10 + $0x340] sm:$0xff]
    %v370 = vld [vmem:[#allocation10 + $0x348] sm:$0xff]
    %v371 = vld [vmem:[#allocation10 + $0x350] sm:$0xff]
    %v372 = vld [vmem:[#allocation10 + $0x358] sm:$0xff]
    %v373 = vld [vmem:[#allocation10 + $0x360] sm:$0xff]
    %v374 = vld [vmem:[#allocation10 + $0x368] sm:$0xff]
    %v375 = vld [vmem:[#allocation10 + $0x370] sm:$0xff]
    %v376 = vld [vmem:[#allocation10 + $0x378] sm:$0xff]
    %v377 = vld [vmem:[%s7] sm:$0xff]
    %v379 = vlaneseq
    %v380 = vshrl.u32 %v379, 7
    %v381 = vsub.s32 0, %v380
    %v382 = vrot.slane %v377, %v381
    %v383 = vlaneseq
    %v384 = vshrl.u32 %v383, 7
    %v385 = vsub.s32 1, %v384
    %v386 = vrot.slane %v377, %v385
    %v387 = vlaneseq
    %v388 = vshrl.u32 %v387, 7
    %v389 = vsub.s32 2, %v388
    %v390 = vrot.slane %v377, %v389
    %v391 = vlaneseq
    %v392 = vshrl.u32 %v391, 7
    %v393 = vsub.s32 3, %v392
    %v394 = vrot.slane %v377, %v393
    %v395 = vlaneseq
    %v396 = vshrl.u32 %v395, 7
    %v397 = vsub.s32 4, %v396
    %v398 = vrot.slane %v377, %v397
    %v399 = vlaneseq
    %v400 = vshrl.u32 %v399, 7
    %v401 = vsub.s32 5, %v400
    %v402 = vrot.slane %v377, %v401
    %v403 = vlaneseq
    %v404 = vshrl.u32 %v403, 7
    %v405 = vsub.s32 6, %v404
    %v406 = vrot.slane %v377, %v405
    %414 = vmatprep.subr.mxu0 %v371
    %415 = vmatpush1.msra.mxu0 %v370
    %416 = vmatprep.subr.mxu0 %v364
    %417 = vmatpush1.msra.mxu0 %v363
    %418 = vmatprep.subr.mxu0 %v357
    %419 = vmatpush1.msra.mxu0 %v356
    %420 = vmatprep.subr.mxu0 %v350
    %421 = vmatpush1.msra.mxu0 %v349
    %422 = vmatprep.subr.mxu0 %v343
    %423 = vmatpush1.msra.mxu0 %v342
    %424 = vmatprep.subr.mxu0 %v336
    %425 = vmatpush1.msra.mxu0 %v335
    %426 = vmatprep.subr.mxu0 %v329
    %427 = vmatpush1.msra.mxu0 %v328
    %428 = vmatprep.subr.mxu0 %v322
    %429 = vmatpush1.msra.mxu0 %v321
    %430 = vmatprep.subr.mxu0 %v315
    %431 = vmatpush1.msra.mxu0 %v314
    %432 = vmatprep.subr.mxu0 %v308
    %433 = vmatpush1.msra.mxu0 %v307
    %434 = vmatprep.subr.mxu0 %v301
    %435 = vmatpush1.msra.mxu0 %v300
    %436 = vmatprep.subr.mxu0 %v294
    %437 = vmatpush1.msra.mxu0 %v293
    %438 = vmatprep.subr.mxu0 %v287
    %439 = vmatpush1.msra.mxu0 %v286
    %440 = vmatprep.subr.mxu0 %v280
    %441 = vmatpush1.msra.mxu0 %v279
    %442 = vmatprep.subr.mxu0 %v273
    %443 = vmatpush1.msra.mxu0 %v272
    %444 = vmatprep.subr.mxu0 %v266
    %445 = vmatpush1.msra.mxu0 %v265
    %446 = vmatprep.subr.mxu0 0.0
    %447 = vmatpush2.msra.mxu0 0.0
    %448 = vmatprep.subr.mxu0 0.0
    %449 = vmatpush2.msra.mxu0 0.0
    %450 = vmatprep.subr.mxu0 0.0
    %451 = vmatpush2.msra.mxu0 0.0
    %452 = vmatprep.subr.mxu0 0.0
    %453 = vmatpush2.msra.mxu0 0.0
    %454 = vmatprep.subr.mxu0 0.0
    %455 = vmatpush2.msra.mxu0 0.0
    %456 = vmatprep.subr.mxu0 0.0
    %457 = vmatpush2.msra.mxu0 0.0
    %458 = vmatprep.subr.mxu0 0.0
    %459 = vmatpush2.msra.mxu0 0.0
    %460 = vmatprep.subr.mxu0 0.0
    %461 = vmatpush2.msra.mxu0 0.0
    %462 = vmatprep.subr.mxu0 0.0
    %463 = vmatpush2.msra.mxu0 0.0
    %464 = vmatprep.subr.mxu0 0.0
    %465 = vmatpush2.msra.mxu0 0.0
    %466 = vmatprep.subr.mxu0 0.0
    %467 = vmatpush2.msra.mxu0 0.0
    %468 = vmatprep.subr.mxu0 0.0
    %469 = vmatpush2.msra.mxu0 0.0
    %470 = vmatprep.subr.mxu0 0.0
    %471 = vmatpush2.msra.mxu0 0.0
    %472 = vmatprep.subr.mxu0 0.0
    %473 = vmatpush2.msra.mxu0 0.0
    %474 = vmatprep.subr.mxu0 0.0
    %475 = vmatpush2.msra.mxu0 0.0
    %476 = vmatprep.subr.mxu0 0.0
    %477 = vmatpush2.msra.mxu0 0.0
    %478 = vmatprep.mubr.f32.mxu0 0.0
    %479 = vmatmul.mubr.f32.gmra.mxu0 %v264
    %v480 = vpop.f32.mrf.mxu0
    %v481 = vadd.f32 %v382, %v480
    %v482 = vpop.f32.mrf.mxu0
    %v483 = vadd.f32 %v386, %v482
    %484 = vdwg.mxu0
    %485 = vmatprep.subr.mxu0 %v373
    %486 = vmatpush1.msra.mxu0 %v372
    %487 = vmatprep.subr.mxu0 %v366
    %488 = vmatpush1.msra.mxu0 %v365
    %489 = vmatprep.subr.mxu0 %v359
    %490 = vmatpush1.msra.mxu0 %v358
    %491 = vmatprep.subr.mxu0 %v352
    %492 = vmatpush1.msra.mxu0 %v351
    %493 = vmatprep.subr.mxu0 %v345
    %494 = vmatpush1.msra.mxu0 %v344
    %495 = vmatprep.subr.mxu0 %v338
    %496 = vmatpush1.msra.mxu0 %v337
    %497 = vmatprep.subr.mxu0 %v331
    %498 = vmatpush1.msra.mxu0 %v330
    %499 = vmatprep.subr.mxu0 %v324
    %500 = vmatpush1.msra.mxu0 %v323
    %501 = vmatprep.subr.mxu0 %v317
    %502 = vmatpush1.msra.mxu0 %v316
    %503 = vmatprep.subr.mxu0 %v310
    %504 = vmatpush1.msra.mxu0 %v309
    %505 = vmatprep.subr.mxu0 %v303
    %506 = vmatpush1.msra.mxu0 %v302
    %507 = vmatprep.subr.mxu0 %v296
    %508 = vmatpush1.msra.mxu0 %v295
    %509 = vmatprep.subr.mxu0 %v289
    %510 = vmatpush1.msra.mxu0 %v288
    %511 = vmatprep.subr.mxu0 %v282
    %512 = vmatpush1.msra.mxu0 %v281
    %513 = vmatprep.subr.mxu0 %v275
    %514 = vmatpush1.msra.mxu0 %v274
    %515 = vmatprep.subr.mxu0 %v268
    %516 = vmatpush1.msra.mxu0 %v267
    %517 = vmatprep.subr.mxu0 0.0
    %518 = vmatpush2.msra.mxu0 0.0
    %519 = vmatprep.subr.mxu0 0.0
    %520 = vmatpush2.msra.mxu0 0.0
    %521 = vmatprep.subr.mxu0 0.0
    %522 = vmatpush2.msra.mxu0 0.0
    %523 = vmatprep.subr.mxu0 0.0
    %524 = vmatpush2.msra.mxu0 0.0
    %525 = vmatprep.subr.mxu0 0.0
    %526 = vmatpush2.msra.mxu0 0.0
    %527 = vmatprep.subr.mxu0 0.0
    %528 = vmatpush2.msra.mxu0 0.0
    %529 = vmatprep.subr.mxu0 0.0
    %530 = vmatpush2.msra.mxu0 0.0
    %531 = vmatprep.subr.mxu0 0.0
    %532 = vmatpush2.msra.mxu0 0.0
    %533 = vmatprep.subr.mxu0 0.0
    %534 = vmatpush2.msra.mxu0 0.0
    %535 = vmatprep.subr.mxu0 0.0
    %536 = vmatpush2.msra.mxu0 0.0
    %537 = vmatprep.subr.mxu0 0.0
    %538 = vmatpush2.msra.mxu0 0.0
    %539 = vmatprep.subr.mxu0 0.0
    %540 = vmatpush2.msra.mxu0 0.0
    %541 = vmatprep.subr.mxu0 0.0
    %542 = vmatpush2.msra.mxu0 0.0
    %543 = vmatprep.subr.mxu0 0.0
    %544 = vmatpush2.msra.mxu0 0.0
    %545 = vmatprep.subr.mxu0 0.0
    %546 = vmatpush2.msra.mxu0 0.0
    %547 = vmatprep.subr.mxu0 0.0
    %548 = vmatpush2.msra.mxu0 0.0
    %549 = vmatprep.mubr.f32.mxu0 0.0
    %550 = vmatmul.mubr.f32.gmra.mxu0 %v264
    %v551 = vpop.f32.mrf.mxu0
    %v552 = vadd.f32 %v390, %v551
    %v553 = vpop.f32.mrf.mxu0
    %v554 = vadd.f32 %v394, %v553
    %555 = vdwg.mxu0
    %556 = vmatprep.subr.mxu0 %v375
    %557 = vmatpush1.msra.mxu0 %v374
    %558 = vmatprep.subr.mxu0 %v368
    %559 = vmatpush1.msra.mxu0 %v367
    %560 = vmatprep.subr.mxu0 %v361
    %561 = vmatpush1.msra.mxu0 %v360
    %562 = vmatprep.subr.mxu0 %v354
    %563 = vmatpush1.msra.mxu0 %v353
    %564 = vmatprep.subr.mxu0 %v347
    %565 = vmatpush1.msra.mxu0 %v346
    %566 = vmatprep.subr.mxu0 %v340
    %567 = vmatpush1.msra.mxu0 %v339
    %568 = vmatprep.subr.mxu0 %v333
    %569 = vmatpush1.msra.mxu0 %v332
    %570 = vmatprep.subr.mxu0 %v326
    %571 = vmatpush1.msra.mxu0 %v325
    %572 = vmatprep.subr.mxu0 %v319
    %573 = vmatpush1.msra.mxu0 %v318
    %574 = vmatprep.subr.mxu0 %v312
    %575 = vmatpush1.msra.mxu0 %v311
    %576 = vmatprep.subr.mxu0 %v305
    %577 = vmatpush1.msra.mxu0 %v304
    %578 = vmatprep.subr.mxu0 %v298
    %579 = vmatpush1.msra.mxu0 %v297
    %580 = vmatprep.subr.mxu0 %v291
    %581 = vmatpush1.msra.mxu0 %v290
    %582 = vmatprep.subr.mxu0 %v284
    %583 = vmatpush1.msra.mxu0 %v283
    %584 = vmatprep.subr.mxu0 %v277
    %585 = vmatpush1.msra.mxu0 %v276
    %586 = vmatprep.subr.mxu0 %v270
    %587 = vmatpush1.msra.mxu0 %v269
    %588 = vmatprep.subr.mxu0 0.0
    %589 = vmatpush2.msra.mxu0 0.0
    %590 = vmatprep.subr.mxu0 0.0
    %591 = vmatpush2.msra.mxu0 0.0
    %592 = vmatprep.subr.mxu0 0.0
    %593 = vmatpush2.msra.mxu0 0.0
    %594 = vmatprep.subr.mxu0 0.0
    %595 = vmatpush2.msra.mxu0 0.0
    %596 = vmatprep.subr.mxu0 0.0
    %597 = vmatpush2.msra.mxu0 0.0
    %598 = vmatprep.subr.mxu0 0.0
    %599 = vmatpush2.msra.mxu0 0.0
    %600 = vmatprep.subr.mxu0 0.0
    %601 = vmatpush2.msra.mxu0 0.0
    %602 = vmatprep.subr.mxu0 0.0
    %603 = vmatpush2.msra.mxu0 0.0
    %604 = vmatprep.subr.mxu0 0.0
    %605 = vmatpush2.msra.mxu0 0.0
    %606 = vmatprep.subr.mxu0 0.0
    %607 = vmatpush2.msra.mxu0 0.0
    %608 = vmatprep.subr.mxu0 0.0
    %609 = vmatpush2.msra.mxu0 0.0
    %610 = vmatprep.subr.mxu0 0.0
    %611 = vmatpush2.msra.mxu0 0.0
    %612 = vmatprep.subr.mxu0 0.0
    %613 = vmatpush2.msra.mxu0 0.0
    %614 = vmatprep.subr.mxu0 0.0
    %615 = vmatpush2.msra.mxu0 0.0
    %616 = vmatprep.subr.mxu0 0.0
    %617 = vmatpush2.msra.mxu0 0.0
    %618 = vmatprep.subr.mxu0 0.0
    %619 = vmatpush2.msra.mxu0 0.0
    %620 = vmatprep.mubr.f32.mxu0 0.0
    %621 = vmatmul.mubr.f32.gmra.mxu0 %v264
    %v622 = vpop.f32.mrf.mxu0
    %v623 = vadd.f32 %v398, %v622
    %v624 = vpop.f32.mrf.mxu0
    %v625 = vadd.f32 %v402, %v624
    %626 = vdwg.mxu0
    %627 = vmatprep.subr.mxu0 0.0
    %628 = vmatpush1.msra.mxu0 %v376
    %629 = vmatprep.subr.mxu0 0.0
    %630 = vmatpush1.msra.mxu0 %v369
    %631 = vmatprep.subr.mxu0 0.0
    %632 = vmatpush1.msra.mxu0 %v362
    %633 = vmatprep.subr.mxu0 0.0
    %634 = vmatpush1.msra.mxu0 %v355
    %635 = vmatprep.subr.mxu0 0.0
    %636 = vmatpush1.msra.mxu0 %v348
    %637 = vmatprep.subr.mxu0 0.0
    %638 = vmatpush1.msra.mxu0 %v341
    %639 = vmatprep.subr.mxu0 0.0
    %640 = vmatpush1.msra.mxu0 %v334
    %641 = vmatprep.subr.mxu0 0.0
    %642 = vmatpush1.msra.mxu0 %v327
    %643 = vmatprep.subr.mxu0 0.0
    %644 = vmatpush1.msra.mxu0 %v320
    %645 = vmatprep.subr.mxu0 0.0
    %646 = vmatpush1.msra.mxu0 %v313
    %647 = vmatprep.subr.mxu0 0.0
    %648 = vmatpush1.msra.mxu0 %v306
    %649 = vmatprep.subr.mxu0 0.0
    %650 = vmatpush1.msra.mxu0 %v299
    %651 = vmatprep.subr.mxu0 0.0
    %652 = vmatpush1.msra.mxu0 %v292
    %653 = vmatprep.subr.mxu0 0.0
    %654 = vmatpush1.msra.mxu0 %v285
    %655 = vmatprep.subr.mxu0 0.0
    %656 = vmatpush1.msra.mxu0 %v278
    %657 = vmatprep.subr.mxu0 0.0
    %658 = vmatpush1.msra.mxu0 %v271
    %659 = vmatprep.subr.mxu0 0.0
    %660 = vmatpush2.msra.mxu0 0.0
    %661 = vmatprep.subr.mxu0 0.0
    %662 = vmatpush2.msra.mxu0 0.0
    %663 = vmatprep.subr.mxu0 0.0
    %664 = vmatpush2.msra.mxu0 0.0
    %665 = vmatprep.subr.mxu0 0.0
    %666 = vmatpush2.msra.mxu0 0.0
    %667 = vmatprep.subr.mxu0 0.0
    %668 = vmatpush2.msra.mxu0 0.0
    %669 = vmatprep.subr.mxu0 0.0
    %670 = vmatpush2.msra.mxu0 0.0
    %671 = vmatprep.subr.mxu0 0.0
    %672 = vmatpush2.msra.mxu0 0.0
    %673 = vmatprep.subr.mxu0 0.0
    %674 = vmatpush2.msra.mxu0 0.0
    %675 = vmatprep.subr.mxu0 0.0
    %676 = vmatpush2.msra.mxu0 0.0
    %677 = vmatprep.subr.mxu0 0.0
    %678 = vmatpush2.msra.mxu0 0.0
    %679 = vmatprep.subr.mxu0 0.0
    %680 = vmatpush2.msra.mxu0 0.0
    %681 = vmatprep.subr.mxu0 0.0
    %682 = vmatpush2.msra.mxu0 0.0
    %683 = vmatprep.subr.mxu0 0.0
    %684 = vmatpush2.msra.mxu0 0.0
    %685 = vmatprep.subr.mxu0 0.0
    %686 = vmatpush2.msra.mxu0 0.0
    %687 = vmatprep.subr.mxu0 0.0
    %688 = vmatpush2.msra.mxu0 0.0
    %689 = vmatprep.subr.mxu0 0.0
    %690 = vmatpush2.msra.mxu0 0.0
    %691 = vmatprep.mubr.f32.mxu0 0.0
    %692 = vmatmul.mubr.f32.gmra.mxu0 %v264
    %v693 = vpop.f32.mrf.mxu0
    %v694 = vadd.f32 %v406, %v693
    %v695 = vpop.f32.mrf.mxu0
    %696 = vdwg.mxu0
    %697 = vst [vmem:[#allocation12] sm:$0xff] %v481
    %698 = vst [vmem:[#allocation12 + $0x8] sm:$0xff] %v483
    %699 = vst [vmem:[#allocation12 + $0x10] sm:$0xff] %v552
    %700 = vst [vmem:[#allocation12 + $0x18] sm:$0xff] %v554
    %701 = vst [vmem:[#allocation12 + $0x20] sm:$0xff] %v623
    %702 = vst [vmem:[#allocation12 + $0x28] sm:$0xff] %v625
    %vm703 = vcmask 130048
    %704 = vst.msk [vmem:[#allocation12 + $0x30] sm:$0xff] %vm703, %v694
    // Predicated region
    $region46: #{tpu_custom_call.1} parent=1 // pred_check
      _
    $region47: #{tpu_custom_call.1} parent=1 // pred_check_branch
      %706 = sbr.rel (0) target = $region49
    $region48: #{tpu_custom_call.1} parent=1 // pred_region
      %s708 = ssub.s32 896, 896
      %709 = vsyncadd [#allocation6], %s708
      %s711 = sshll.u32 [#allocation12], 4
      %s712 = int_to_ptr.vmem [resolvable:$true] %s711
      %714 = dma.vmem_to_hbm [thread:$0]  %s712, 896, %s8, [#allocation6]
    $region49: #{tpu_custom_call.1} parent=1 // pred_fallthru
      _
    // Predicated region
    $region50: #{tpu_custom_call.1} parent=1 // pred_check
      _
    $region51: #{tpu_custom_call.1} parent=1 // pred_check_branch
      %716 = sbr.rel (0) target = $region53
    $region52: #{tpu_custom_call.1} parent=1 // pred_region
      %717 = dma.done [#allocation6], 896
    $region53: #{tpu_custom_call.1} parent=1 // pred_fallthru
      _
    %718 = vsyncpa [#allocation5], 1
    %719 = vsyncpa [#allocation8], 1
    %720 = vsyncpa [#allocation11], 1
    %721 = vsyncpa [#allocation6], 1

</llo_original>
